<compile_context>
chip_gen: v5e
topology: v5e:2x2
jax: 0.10.0
libtpu: 0.0.40
codegen_flags: <defaults>
</compile_context>

<pallas_src>
import numpy as np
import jax
import jax.numpy as jnp
from jax.experimental import pallas as pl
from jax.experimental.pallas import tpu as pltpu


# ----------------------------------------------------------------------------
# Deterministic parameter construction (mirrors AntiAliasInterpolation2d.__init__)
# ----------------------------------------------------------------------------
def _gaussian_1d(scale):
    sigma = (1.0 / scale - 1.0) / 2.0
    kernel_size = 2 * round(sigma * 4) + 1
    ka = kernel_size // 2
    kb = ka  # kernel_size is odd, so kb == ka
    mean = (kernel_size - 1) / 2.0
    idx = np.arange(kernel_size, dtype=np.float64)
    g = np.exp(-((idx - mean) ** 2) / (2.0 * sigma ** 2))
    g = g / g.sum()  # separable normalization == normalizing the 2-D outer product
    return g.astype(np.float32), kernel_size, ka, kb


def _build_matrices(H, W, scale):
    """Blur+subsample matrices with the constant-zero padding absorbed."""
    g, K, ka, kb = _gaussian_1d(scale)
    s = int(1.0 / scale)
    Hp, Wp = H + ka + kb, W + ka + kb
    Ho, Wo = -(-H // s), -(-W // s)          # ceil(H/s), ceil(W/s)
    vmat_full = np.zeros((Ho, Hp), np.float32)
    for i in range(Ho):
        vmat_full[i, i * s: i * s + K] = g
    hmat_full = np.zeros((Wp, Wo), np.float32)
    for j in range(Wo):
        hmat_full[j * s: j * s + K, j] = g
    # pad(x) rows/cols outside [ka, ka+H)/[ka, ka+W) are zero -> drop those
    # columns/rows of the blur matrices instead of materializing the padding.
    vmat = np.ascontiguousarray(vmat_full[:, ka:ka + H])   # (Ho, H)
    hmat = np.ascontiguousarray(hmat_full[ka:ka + W, :])   # (W, Wo)
    return vmat, hmat, Ho, Wo


def _key(scale):
    return "prediction_" + str(scale).replace(".", "-").replace("-", ".")


# ----------------------------------------------------------------------------
# Fused Pallas kernel: one block of TB channel-slices, all scales at once
# ----------------------------------------------------------------------------
def _make_kernel(num_scales):
    def kernel(*refs):
        x_ref = refs[0]                                  # (TB, H, W)
        mat_refs = refs[1:1 + 2 * num_scales]            # per scale: Hm, Vt (bf16)
        out_refs = refs[1 + 2 * num_scales:]             # per scale: (TB, Ho, Wo)
        tb, h, w = x_ref.shape
        # Single bf16 rounding of the input; batch folded into rows so the MXU
        # sees one big shared-weight 2-D matmul per pass (no matrix broadcast).
        xb = x_ref[...].astype(jnp.bfloat16).reshape(tb * h, w)        # (TB*H, W)
        for si in range(num_scales):
            hm_ref = mat_refs[2 * si]                    # (W, Wo)  VMEM-resident
            vt_ref = mat_refs[2 * si + 1]                # (H, Ho)  VMEM-resident
            o_ref = out_refs[si]
            wo = hm_ref.shape[1]
            ho = vt_ref.shape[1]
            # column blur + column subsample: (TB*H, W) @ (W, Wo)
            t = jnp.dot(xb, hm_ref[...], preferred_element_type=jnp.float32)
            # bring H to the minor axis so the row pass is also one shared-weight
            # 2-D matmul (minor-dims transpose -> XLU slot, hidden under HBM DMA)
            t = jnp.transpose(t.astype(jnp.bfloat16).reshape(tb, h, wo),
                              (0, 2, 1)).reshape(tb * wo, h)           # (TB*Wo, H)
            # row blur + row subsample: (TB*Wo, H) @ (H, Ho)
            y = jnp.dot(t, vt_ref[...], preferred_element_type=jnp.float32)
            y = jnp.transpose(y.reshape(tb, wo, ho), (0, 2, 1))        # (TB, Ho, Wo)
            o_ref[...] = y.astype(o_ref.dtype)
    return kernel


# ----------------------------------------------------------------------------
# Block-size / VMEM tuning
# ----------------------------------------------------------------------------
def _chip_tuning():
    """(block budget bytes, vmem_limit cap bytes, prefer even grid steps)."""
    kind = ""
    try:
        kind = jax.devices()[0].device_kind.lower()
    except Exception:
        pass
    if "v7" in kind:
        # 64 MiB physical VMEM, 2 TensorCores: modest blocks, even #steps.
        return 14 << 20, 48 << 20, True
    if "v5 lite" in kind or "v5e" in kind:
        # 128 MiB physical VMEM (16 MiB scoped default -> explicit limit needed).
        return 18 << 20, 56 << 20, False
    # v6e & default: 128 MiB physical VMEM, single TensorCore: big blocks.
    return 22 << 20, 64 << 20, False


def _pick_block_batch(B, bytes_per_slice, budget_bytes, prefer_even_steps):
    """Largest channel-slice block fitting the budget, with balanced grid steps.

    TB does NOT have to divide B (ragged last block is handled by Pallas; every
    channel slice is independent, so padded/garbage rows never pollute valid ones).
    """
    max_tb = max(1, min(B, budget_bytes // max(1, bytes_per_slice)))
    steps = -(-B // max_tb)
    if prefer_even_steps and B >= 2 and steps % 2 == 1:
        steps += 1                              # v7x: balance the two TensorCores
    tb = max(1, -(-B // steps))
    if prefer_even_steps and B >= 2:
        while tb > 1 and (-(-B // tb)) % 2 == 1:
            tb -= 1
    return tb


def _fused_pyramid(x, scales):
    """One pallas_call producing the downsampled output for every scale != 1."""
    N, C, H, W = x.shape
    B = N * C
    x3 = x.reshape(B, H, W)

    scale_mats = []
    for s in scales:
        vm, hm, Ho, Wo = _build_matrices(H, W, s)
        # compile-time constants: cast to bf16 once on the host
        hm_b = jnp.asarray(hm, dtype=jnp.bfloat16)                 # (W, Wo)
        vt_b = jnp.asarray(np.ascontiguousarray(vm.T), dtype=jnp.bfloat16)  # (H, Ho)
        scale_mats.append((hm_b, vt_b, Ho, Wo))

    budget, vmem_cap, prefer_even = _chip_tuning()

    # Per-channel-slice VMEM working set: input block double-buffered (f32) +
    # one bf16 copy; per-scale intermediates counted once; output double-buffered.
    per_slice = H * W * (2 * 4 + 2)
    for (_, _, Ho, Wo) in scale_mats:
        per_slice += 8 * H * Wo + 20 * Ho * Wo
    TB = _pick_block_batch(B, per_slice, budget, prefer_even)
    grid = (pl.cdiv(B, TB),)

    # TODO(synk): if profiling shows exposed input DMA at this TB, switch this
    # spec to pipeline_mode=pl.Buffered(3).
    in_specs = [pl.BlockSpec((TB, H, W), lambda b: (b, 0, 0))]
    args = [x3]
    mat_bytes = 0
    for (hm_b, vt_b, _, _) in scale_mats:
        # full-array blocks with constant index_map -> stay VMEM-resident
        in_specs.append(pl.BlockSpec(tuple(hm_b.shape), lambda b: (0, 0)))
        in_specs.append(pl.BlockSpec(tuple(vt_b.shape), lambda b: (0, 0)))
        args.append(hm_b)
        args.append(vt_b)
        mat_bytes += 2 * (int(hm_b.size) + int(vt_b.size))         # bf16

    out_specs = []
    out_shapes = []
    for (_, _, Ho, Wo) in scale_mats:
        out_specs.append(pl.BlockSpec((TB, Ho, Wo), lambda b: (b, 0, 0)))
        out_shapes.append(jax.ShapeDtypeStruct((B, Ho, Wo), x.dtype))

    est = TB * per_slice + 2 * mat_bytes + (4 << 20)
    vmem_limit = int(min(vmem_cap, max(est, 24 << 20)))

    outs = pl.pallas_call(
        _make_kernel(len(scale_mats)),
        out_shape=tuple(out_shapes),
        grid=grid,
        in_specs=in_specs,
        out_specs=tuple(out_specs),
        compiler_params=pltpu.CompilerParams(
            dimension_semantics=("parallel",),
            vmem_limit_bytes=vmem_limit),
    )(*args)

    return [o.reshape(N, C, Ho, Wo)
            for o, (_, _, Ho, Wo) in zip(outs, scale_mats)]


def image_pyramide(x, scales):
    """Forward pass of ImagePyramide: dict of per-scale anti-aliased downsamples."""
    out_dict = {}
    work_scales = [s for s in scales if float(s) != 1.0]
    for s in scales:
        if float(s) == 1.0:
            out_dict[_key(s)] = x   # scale == 1 is the identity in the module
    if work_scales:
        outs = _fused_pyramid(x, work_scales)
        for s, o in zip(work_scales, outs):
            out_dict[_key(s)] = o
    return out_dict


# ----------------------------------------------------------------------------
# Pure numpy reference (direct depthwise conv2d + strided slice) for checking
# ----------------------------------------------------------------------------
def _numpy_ref(x_np, scale):
    if float(scale) == 1.0:
        return x_np
    g, K, ka, kb = _gaussian_1d(scale)
    w2 = np.outer(g, g)
    s = int(1.0 / scale)
    N, C, H, W = x_np.shape
    xp = np.pad(x_np, ((0, 0), (0, 0), (ka, kb), (ka, kb)))
    Ho, Wo = -(-H // s), -(-W // s)
    out = np.zeros((N, C, Ho, Wo), np.float32)
    for i in range(Ho):
        for j in range(Wo):
            patch = xp[:, :, i * s:i * s + K, j * s:j * s + K]
            out[:, :, i, j] = np.sum(patch * w2, axis=(2, 3))
    return out


if __name__ == "__main__":
    scales = [1, 0.5, 0.25]
    N, C, H, W = 2, 4, 16, 16

    key = jax.random.PRNGKey(0)
    x = jax.random.normal(key, (N, C, H, W), dtype=jnp.float32)

    out = image_pyramide(x, scales)
    out = jax.tree_util.tree_map(jax.block_until_ready, out)

    # correctness check against a direct numpy depthwise-conv reference
    # (bf16 MXU inputs with f32 accumulation -> slightly loosened tolerance)
    x_np = np.asarray(x)
    for scale in scales:
        k = _key(scale)
        np.testing.assert_allclose(
            np.asarray(out[k]), _numpy_ref(x_np, scale), rtol=2e-2, atol=2e-2
        )

    print("KERNEL_OK")
</pallas_src>

<mosaic_0001>
module attributes {stable_mosaic.version = 11 : i64} {
  func.func @kernel(%arg0: i32, %arg1: memref<8x16x16xf32, #tpu.memory_space<vmem>>, %arg2: memref<16x8xbf16, #tpu.memory_space<vmem>>, %arg3: memref<16x8xbf16, #tpu.memory_space<vmem>>, %arg4: memref<16x4xbf16, #tpu.memory_space<vmem>>, %arg5: memref<16x4xbf16, #tpu.memory_space<vmem>>, %arg6: memref<8x8x8xf32, #tpu.memory_space<vmem>>, %arg7: memref<8x4x4xf32, #tpu.memory_space<vmem>>) attributes {dimension_semantics = [#tpu.dimension_semantics<parallel>], iteration_bounds = array<i64: 1>, scalar_prefetch = 0 : i64, scratch_operands = 0 : i64, tpu.core_type = #tpu.core_type<tc>, window_params = [{transform_indices = @transform_0, window_bounds = array<i64: 8, 16, 16>}, {pipeline_mode = #tpu.pipeline_mode<synchronous>, transform_indices = @transform_1, window_bounds = array<i64: 16, 8>}, {pipeline_mode = #tpu.pipeline_mode<synchronous>, transform_indices = @transform_2, window_bounds = array<i64: 16, 8>}, {pipeline_mode = #tpu.pipeline_mode<synchronous>, transform_indices = @transform_3, window_bounds = array<i64: 16, 4>}, {pipeline_mode = #tpu.pipeline_mode<synchronous>, transform_indices = @transform_4, window_bounds = array<i64: 16, 4>}, {transform_indices = @transform_5, window_bounds = array<i64: 8, 8, 8>}, {transform_indices = @transform_6, window_bounds = array<i64: 8, 4, 4>}]} {
    %c0 = arith.constant 0 : index
    %c0_0 = arith.constant 0 : index
    %c0_1 = arith.constant 0 : index
    %0 = vector.load %arg1[%c0, %c0_0, %c0_1] : memref<8x16x16xf32, #tpu.memory_space<vmem>>, vector<8x16x16xf32>
    %1 = arith.truncf %0 : vector<8x16x16xf32> to vector<8x16x16xbf16>
    %2 = vector.shape_cast %1 : vector<8x16x16xbf16> to vector<128x16xbf16>
    %c0_2 = arith.constant 0 : index
    %c0_3 = arith.constant 0 : index
    %3 = vector.load %arg2[%c0_2, %c0_3] : memref<16x8xbf16, #tpu.memory_space<vmem>>, vector<16x8xbf16>
    %cst = arith.constant dense<0.000000e+00> : vector<128x8xf32>
    %4 = tpu.matmul %2, %3, %cst {dimension_numbers = #tpu.dot_dimension_numbers<[1], [0], [0], [1], [0, 0, 1, 1], [], []>} : vector<128x16xbf16>, vector<16x8xbf16>, vector<128x8xf32> -> vector<128x8xf32>
    %5 = arith.truncf %4 : vector<128x8xf32> to vector<128x8xbf16>
    %6 = vector.shape_cast %5 : vector<128x8xbf16> to vector<8x16x8xbf16>
    %7 = tpu.transpose %6, [0, 2, 1] : vector<8x16x8xbf16> -> vector<8x8x16xbf16>
    %8 = vector.shape_cast %7 : vector<8x8x16xbf16> to vector<64x16xbf16>
    %c0_4 = arith.constant 0 : index
    %c0_5 = arith.constant 0 : index
    %9 = vector.load %arg3[%c0_4, %c0_5] : memref<16x8xbf16, #tpu.memory_space<vmem>>, vector<16x8xbf16>
    %cst_6 = arith.constant dense<0.000000e+00> : vector<64x8xf32>
    %10 = tpu.matmul %8, %9, %cst_6 {dimension_numbers = #tpu.dot_dimension_numbers<[1], [0], [0], [1], [0, 0, 1, 1], [], []>} : vector<64x16xbf16>, vector<16x8xbf16>, vector<64x8xf32> -> vector<64x8xf32>
    %11 = vector.shape_cast %10 : vector<64x8xf32> to vector<8x8x8xf32>
    %12 = tpu.transpose %11, [0, 2, 1] : vector<8x8x8xf32> -> vector<8x8x8xf32>
    %c0_7 = arith.constant 0 : index
    %c0_8 = arith.constant 0 : index
    %c0_9 = arith.constant 0 : index
    %13 = vector.load %arg6[%c0_7, %c0_8, %c0_9] : memref<8x8x8xf32, #tpu.memory_space<vmem>>, vector<8x8x8xf32>
    tpu.vector_store %arg6[%c0_7, %c0_8, %c0_9], %12 {strides = array<i32>} : memref<8x8x8xf32, #tpu.memory_space<vmem>>, vector<8x8x8xf32>,
    %c0_10 = arith.constant 0 : index
    %c0_11 = arith.constant 0 : index
    %14 = vector.load %arg4[%c0_10, %c0_11] : memref<16x4xbf16, #tpu.memory_space<vmem>>, vector<16x4xbf16>
    %cst_12 = arith.constant dense<0.000000e+00> : vector<128x4xf32>
    %15 = tpu.matmul %2, %14, %cst_12 {dimension_numbers = #tpu.dot_dimension_numbers<[1], [0], [0], [1], [0, 0, 1, 1], [], []>} : vector<128x16xbf16>, vector<16x4xbf16>, vector<128x4xf32> -> vector<128x4xf32>
    %16 = arith.truncf %15 : vector<128x4xf32> to vector<128x4xbf16>
    %17 = vector.shape_cast %16 : vector<128x4xbf16> to vector<8x16x4xbf16>
    %18 = tpu.transpose %17, [0, 2, 1] : vector<8x16x4xbf16> -> vector<8x4x16xbf16>
    %19 = vector.shape_cast %18 : vector<8x4x16xbf16> to vector<32x16xbf16>
    %c0_13 = arith.constant 0 : index
    %c0_14 = arith.constant 0 : index
    %20 = vector.load %arg5[%c0_13, %c0_14] : memref<16x4xbf16, #tpu.memory_space<vmem>>, vector<16x4xbf16>
    %cst_15 = arith.constant dense<0.000000e+00> : vector<32x4xf32>
    %21 = tpu.matmul %19, %20, %cst_15 {dimension_numbers = #tpu.dot_dimension_numbers<[1], [0], [0], [1], [0, 0, 1, 1], [], []>} : vector<32x16xbf16>, vector<16x4xbf16>, vector<32x4xf32> -> vector<32x4xf32>
    %22 = vector.shape_cast %21 : vector<32x4xf32> to vector<8x4x4xf32>
    %23 = tpu.transpose %22, [0, 2, 1] : vector<8x4x4xf32> -> vector<8x4x4xf32>
    %c0_16 = arith.constant 0 : index
    %c0_17 = arith.constant 0 : index
    %c0_18 = arith.constant 0 : index
    %24 = vector.load %arg7[%c0_16, %c0_17, %c0_18] : memref<8x4x4xf32, #tpu.memory_space<vmem>>, vector<8x4x4xf32>
    tpu.vector_store %arg7[%c0_16, %c0_17, %c0_18], %23 {strides = array<i32>} : memref<8x4x4xf32, #tpu.memory_space<vmem>>, vector<8x4x4xf32>,
    return
  }
  func.func @transform_0(%arg0: i32) -> (i32, i32, i32) {
    %c0_i32 = arith.constant 0 : i32
    %c0_i32_0 = arith.constant 0 : i32
    %c0_i32_1 = arith.constant 0 : i32
    return %arg0, %c0_i32, %c0_i32_0 : i32, i32, i32
  }
  func.func @transform_1(%arg0: i32) -> (i32, i32) {
    %c0_i32 = arith.constant 0 : i32
    %c0_i32_0 = arith.constant 0 : i32
    %c0_i32_1 = arith.constant 0 : i32
    return %c0_i32, %c0_i32_0 : i32, i32
  }
  func.func @transform_2(%arg0: i32) -> (i32, i32) {
    %c0_i32 = arith.constant 0 : i32
    %c0_i32_0 = arith.constant 0 : i32
    %c0_i32_1 = arith.constant 0 : i32
    return %c0_i32, %c0_i32_0 : i32, i32
  }
  func.func @transform_3(%arg0: i32) -> (i32, i32) {
    %c0_i32 = arith.constant 0 : i32
    %c0_i32_0 = arith.constant 0 : i32
    %c0_i32_1 = arith.constant 0 : i32
    return %c0_i32, %c0_i32_0 : i32, i32
  }
  func.func @transform_4(%arg0: i32) -> (i32, i32) {
    %c0_i32 = arith.constant 0 : i32
    %c0_i32_0 = arith.constant 0 : i32
    %c0_i32_1 = arith.constant 0 : i32
    return %c0_i32, %c0_i32_0 : i32, i32
  }
  func.func @transform_5(%arg0: i32) -> (i32, i32, i32) {
    %c0_i32 = arith.constant 0 : i32
    %c0_i32_0 = arith.constant 0 : i32
    %c0_i32_1 = arith.constant 0 : i32
    return %arg0, %c0_i32, %c0_i32_0 : i32, i32, i32
  }
  func.func @transform_6(%arg0: i32) -> (i32, i32, i32) {
    %c0_i32 = arith.constant 0 : i32
    %c0_i32_0 = arith.constant 0 : i32
    %c0_i32_1 = arith.constant 0 : i32
    return %arg0, %c0_i32, %c0_i32_0 : i32, i32, i32
  }
}

</mosaic_0001>

<llo_original>
// kernel: tpu_custom_call.1
$region0: #{tpu_custom_call.1}
  #allocation0 [shape = 'u32[]', space=smem, size = 0x4, offset = 0x4, fixed_abs, tag = 'smem constant byte address 0x4 - core index']
  #allocation1 [shape = 'u32[72,128]{1,0:T(1,128)}', space=vmem, size = 0x9000, scoped, tag = 'internal scratch']
  %s0 = inlined_call_operand.hbm [shape: f32[8,16,16], index: 0, kind: input, shape index: {}]
  %s1 = inlined_call_operand.vmem [shape: bf16[16,8], index: 1, kind: input, shape index: {}]
  %s2 = inlined_call_operand.vmem [shape: bf16[16,8], index: 2, kind: input, shape index: {}]
  %s3 = inlined_call_operand.vmem [shape: bf16[16,4], index: 3, kind: input, shape index: {}]
  %s4 = inlined_call_operand.vmem [shape: bf16[16,4], index: 4, kind: input, shape index: {}]
  %s5 = inlined_call_operand.hbm [shape: f32[8,8,8], index: 5, kind: output, shape index: {0}]
  %s6 = inlined_call_operand.vmem [shape: f32[8,4,4], index: 6, kind: output, shape index: {1}]
  %7 = xla_tuple %s5, %s6
  %s8 = sld [smem:[#allocation0]]
  $region42: #{tpu_custom_call.1} parent=0
    _
  %s10 = ssub.s32 1, %s8
  %s11 = scalar_select 0, %s10, %s8
  $region1: #{tpu_custom_call.1} parent=0
    #allocation2 [shape = 'u8[65536]{0}', space=vmem, size = 0x10000, scoped, tag = 'input window, operand 0, single buffered']
    #allocation3 [shape = 's32[1]{0}', space=sflag, size = 0x4, scoped, tag = 'scoped memory for tpu_custom_call.1']
    #allocation4 [shape = 's32[1]{0}', space=sflag, size = 0x4, scoped, tag = 'scoped memory for tpu_custom_call.1']
    #allocation5 [shape = 'u8[32768]{0}', space=vmem, size = 0x8000, scoped, tag = 'output window, operand 0, single buffered']
    %12 = vsyncpa [#allocation3], 0
    %13 = vsyncpa [#allocation4], 0
    // Predicated region
    $region2: #{tpu_custom_call.1} parent=1 // pred_check
      _
    $region3: #{tpu_custom_call.1} parent=1 // pred_check_branch
      %15 = sbr.rel (0) target = $region5
    $region4: #{tpu_custom_call.1} parent=1 // pred_region
      %17 = vsyncadd [#allocation3], 0
      %s18 = sshll.u32 %s0, 4
      %s19 = int_to_ptr.hbm [resolvable:$true] %s18
      %s20 = sshll.u32 [#allocation2], 4
      %s21 = int_to_ptr.vmem [resolvable:$true] %s20
      %26 = dma.hbm_to_vmem [thread:$0]  %s19, 2048, %s21, [#allocation3], 128, 128, 8
    $region5: #{tpu_custom_call.1} parent=1 // pred_fallthru
      _
    // Predicated region
    $region6: #{tpu_custom_call.1} parent=1 // pred_check
      _
    $region7: #{tpu_custom_call.1} parent=1 // pred_check_branch
      %28 = sbr.rel (0) target = $region9
    $region8: #{tpu_custom_call.1} parent=1 // pred_region
      _
    $region9: #{tpu_custom_call.1} parent=1 // pred_fallthru
      _
    // Predicated region
    $region10: #{tpu_custom_call.1} parent=1 // pred_check
      _
    $region11: #{tpu_custom_call.1} parent=1 // pred_check_branch
      %30 = sbr.rel (0) target = $region13
    $region12: #{tpu_custom_call.1} parent=1 // pred_region
      _
    $region13: #{tpu_custom_call.1} parent=1 // pred_fallthru
      _
    // Predicated region
    $region14: #{tpu_custom_call.1} parent=1 // pred_check
      _
    $region15: #{tpu_custom_call.1} parent=1 // pred_check_branch
      %32 = sbr.rel (0) target = $region17
    $region16: #{tpu_custom_call.1} parent=1 // pred_region
      _
    $region17: #{tpu_custom_call.1} parent=1 // pred_fallthru
      _
    // Predicated region
    $region18: #{tpu_custom_call.1} parent=1 // pred_check
      _
    $region19: #{tpu_custom_call.1} parent=1 // pred_check_branch
      %34 = sbr.rel (0) target = $region21
    $region20: #{tpu_custom_call.1} parent=1 // pred_region
      _
    $region21: #{tpu_custom_call.1} parent=1 // pred_fallthru
      _
    // Predicated region
    $region22: #{tpu_custom_call.1} parent=1 // pred_check
      _
    $region23: #{tpu_custom_call.1} parent=1 // pred_check_branch
      %36 = sbr.rel (0) target = $region25
    $region24: #{tpu_custom_call.1} parent=1 // pred_region
      %38 = dma.done [#allocation3], 2048
    $region25: #{tpu_custom_call.1} parent=1 // pred_fallthru
      _
    %v40 = vld [vmem:[#allocation2] sm:$0xff]
    %v41 = vld [vmem:[#allocation2 + $0x8] sm:$0xff]
    %v42 = vld [vmem:[#allocation2 + $0x10] sm:$0xff]
    %v43 = vld [vmem:[#allocation2 + $0x18] sm:$0xff]
    %v44 = vld [vmem:[#allocation2 + $0x20] sm:$0xff]
    %v45 = vld [vmem:[#allocation2 + $0x28] sm:$0xff]
    %v46 = vld [vmem:[#allocation2 + $0x30] sm:$0xff]
    %v47 = vld [vmem:[#allocation2 + $0x38] sm:$0xff]
    %v48 = vld [vmem:[#allocation2 + $0x40] sm:$0xff]
    %v49 = vld [vmem:[#allocation2 + $0x48] sm:$0xff]
    %v50 = vld [vmem:[#allocation2 + $0x50] sm:$0xff]
    %v51 = vld [vmem:[#allocation2 + $0x58] sm:$0xff]
    %v52 = vld [vmem:[#allocation2 + $0x60] sm:$0xff]
    %v53 = vld [vmem:[#allocation2 + $0x68] sm:$0xff]
    %v54 = vld [vmem:[#allocation2 + $0x70] sm:$0xff]
    %v55 = vld [vmem:[#allocation2 + $0x78] sm:$0xff]
    %v56 = vpack.c.bf16 %v40, %v40
    %v57 = vpack.c.bf16 %v41, %v41
    %v58 = vpack.c.bf16 %v42, %v42
    %v59 = vpack.c.bf16 %v43, %v43
    %v60 = vpack.c.bf16 %v44, %v44
    %v61 = vpack.c.bf16 %v45, %v45
    %v62 = vpack.c.bf16 %v46, %v46
    %v63 = vpack.c.bf16 %v47, %v47
    %v64 = vpack.c.bf16 %v48, %v48
    %v65 = vpack.c.bf16 %v49, %v49
    %v66 = vpack.c.bf16 %v50, %v50
    %v67 = vpack.c.bf16 %v51, %v51
    %v68 = vpack.c.bf16 %v52, %v52
    %v69 = vpack.c.bf16 %v53, %v53
    %v70 = vpack.c.bf16 %v54, %v54
    %v71 = vpack.c.bf16 %v55, %v55
    %v72 = vld [vmem:[%s1] sm:$0xf]
    %v73 = vld [vmem:[%s1 + $0x4] sm:$0xf]
    %v90 = vunpack.c.l.b16 %v56
    %v91 = vunpack.c.l.b16 %v57
    %v92 = vunpack.c.l.b16 %v58
    %v93 = vunpack.c.l.b16 %v59
    %v94 = vunpack.c.l.b16 %v60
    %v95 = vunpack.c.l.b16 %v61
    %v96 = vunpack.c.l.b16 %v62
    %v97 = vunpack.c.l.b16 %v63
    %v98 = vunpack.c.l.b16 %v64
    %v99 = vunpack.c.l.b16 %v65
    %v100 = vunpack.c.l.b16 %v66
    %v101 = vunpack.c.l.b16 %v67
    %v102 = vunpack.c.l.b16 %v68
    %v103 = vunpack.c.l.b16 %v69
    %v104 = vunpack.c.l.b16 %v70
    %v105 = vunpack.c.l.b16 %v71
    %v106 = vpack.c.b16 %v91, %v90
    %v107 = vpack.c.b16 %v93, %v92
    %v108 = vpack.c.b16 %v95, %v94
    %v109 = vpack.c.b16 %v97, %v96
    %v110 = vpack.c.b16 %v99, %v98
    %v111 = vpack.c.b16 %v101, %v100
    %v112 = vpack.c.b16 %v103, %v102
    %v113 = vpack.c.b16 %v105, %v104
    %v116 = vunpack.c.l.b16 %v72
    %v117 = vunpack.c.l.b16 %v73
    %v118 = vpack.c.b16 %v117, %v116
    %vm120 = vcmask 130048
    %v122 = vsel %vm120, %v106, 0
    %v125 = vsel %vm120, %v107, 0
    %v128 = vsel %vm120, %v108, 0
    %v131 = vsel %vm120, %v109, 0
    %v134 = vsel %vm120, %v110, 0
    %v137 = vsel %vm120, %v111, 0
    %v140 = vsel %vm120, %v112, 0
    %v143 = vsel %vm120, %v113, 0
    %145 = vmatpush.bf16.msra.mxu0 0
    %146 = vmatpush.bf16.msra.mxu0 0
    %147 = vmatpush.bf16.msra.mxu0 0
    %148 = vmatpush.bf16.msra.mxu0 0
    %149 = vmatpush.bf16.msra.mxu0 0
    %150 = vmatpush.bf16.msra.mxu0 0
    %151 = vmatpush.bf16.msra.mxu0 0
    %152 = vmatpush.bf16.msra.mxu0 %v118
    %153 = vmatmul.bf16.gmra.mxu0 %v122
    %v154 = vpop.f32.mrf.mxu0
    %v155 = vadd.f32 0.0, %v154
    %v156 = vpop.f32.mrf.mxu0
    %v157 = vadd.f32 0.0, %v156
    %158 = vmatmul.bf16.gmra.mxu0 %v125
    %v159 = vpop.f32.mrf.mxu0
    %v160 = vadd.f32 0.0, %v159
    %v161 = vpop.f32.mrf.mxu0
    %v162 = vadd.f32 0.0, %v161
    %163 = vmatmul.bf16.gmra.mxu0 %v128
    %v164 = vpop.f32.mrf.mxu0
    %v165 = vadd.f32 0.0, %v164
    %v166 = vpop.f32.mrf.mxu0
    %v167 = vadd.f32 0.0, %v166
    %168 = vmatmul.bf16.gmra.mxu0 %v131
    %v169 = vpop.f32.mrf.mxu0
    %v170 = vadd.f32 0.0, %v169
    %v171 = vpop.f32.mrf.mxu0
    %v172 = vadd.f32 0.0, %v171
    %173 = vmatmul.bf16.gmra.mxu0 %v134
    %v174 = vpop.f32.mrf.mxu0
    %v175 = vadd.f32 0.0, %v174
    %v176 = vpop.f32.mrf.mxu0
    %v177 = vadd.f32 0.0, %v176
    %178 = vmatmul.bf16.gmra.mxu0 %v137
    %v179 = vpop.f32.mrf.mxu0
    %v180 = vadd.f32 0.0, %v179
    %v181 = vpop.f32.mrf.mxu0
    %v182 = vadd.f32 0.0, %v181
    %183 = vmatmul.bf16.gmra.mxu0 %v140
    %v184 = vpop.f32.mrf.mxu0
    %v185 = vadd.f32 0.0, %v184
    %v186 = vpop.f32.mrf.mxu0
    %v187 = vadd.f32 0.0, %v186
    %188 = vmatmul.bf16.gmra.mxu0 %v143
    %v189 = vpop.f32.mrf.mxu0
    %v190 = vadd.f32 0.0, %v189
    %v191 = vpop.f32.mrf.mxu0
    %v192 = vadd.f32 0.0, %v191
    %193 = vdwg.mxu0
    %v194 = vpack.c.bf16 %v155, %v155
    %v195 = vpack.c.bf16 %v157, %v157
    %v196 = vpack.c.bf16 %v160, %v160
    %v197 = vpack.c.bf16 %v162, %v162
    %v198 = vpack.c.bf16 %v165, %v165
    %v199 = vpack.c.bf16 %v167, %v167
    %v200 = vpack.c.bf16 %v170, %v170
    %v201 = vpack.c.bf16 %v172, %v172
    %v202 = vpack.c.bf16 %v175, %v175
    %v203 = vpack.c.bf16 %v177, %v177
    %v204 = vpack.c.bf16 %v180, %v180
    %v205 = vpack.c.bf16 %v182, %v182
    %v206 = vpack.c.bf16 %v185, %v185
    %v207 = vpack.c.bf16 %v187, %v187
    %v208 = vpack.c.bf16 %v190, %v190
    %v209 = vpack.c.bf16 %v192, %v192
    %v226 = vunpack.c.l.b16 %v194
    %v227 = vunpack.c.l.b16 %v195
    %v228 = vunpack.c.l.b16 %v196
    %v229 = vunpack.c.l.b16 %v197
    %v230 = vunpack.c.l.b16 %v198
    %v231 = vunpack.c.l.b16 %v199
    %v232 = vunpack.c.l.b16 %v200
    %v233 = vunpack.c.l.b16 %v201
    %v234 = vunpack.c.l.b16 %v202
    %v235 = vunpack.c.l.b16 %v203
    %v236 = vunpack.c.l.b16 %v204
    %v237 = vunpack.c.l.b16 %v205
    %v238 = vunpack.c.l.b16 %v206
    %v239 = vunpack.c.l.b16 %v207
    %v240 = vunpack.c.l.b16 %v208
    %v241 = vunpack.c.l.b16 %v209
    %v242 = vpack.c.b16 %v227, %v226
    %v243 = vpack.c.b16 %v229, %v228
    %v244 = vpack.c.b16 %v231, %v230
    %v245 = vpack.c.b16 %v233, %v232
    %v246 = vpack.c.b16 %v235, %v234
    %v247 = vpack.c.b16 %v237, %v236
    %v248 = vpack.c.b16 %v239, %v238
    %v249 = vpack.c.b16 %v241, %v240
    %258 = vxpose.xlu0.c.b16.start [1/8] %v242, 128
    %259 = vxpose.xlu0.c.b16.cont [2/8] 0, 128
    %260 = vxpose.xlu0.c.b16.cont [3/8] 0, 128
    %261 = vxpose.xlu0.c.b16.cont [4/8] 0, 128
    %262 = vxpose.xlu0.c.b16.cont [5/8] 0, 128
    %263 = vxpose.xlu0.c.b16.cont [6/8] 0, 128
    %264 = vxpose.xlu0.c.b16.cont [7/8] 0, 128
    %265 = vxpose.xlu0.c.b16.end [8/8] 0, 128
    %v266 = vpop.trf.xlu0
    %v267 = vpop.trf.xlu0
    %v268 = vpop.trf.xlu0
    %v269 = vpop.trf.xlu0
    %v270 = vpop.trf.xlu0
    %v271 = vpop.trf.xlu0
    %v272 = vpop.trf.xlu0
    %v273 = vpop.trf.xlu0
    %274 = vxpose.xlu0.c.b16.start [1/8] %v243, 128
    %275 = vxpose.xlu0.c.b16.cont [2/8] 0, 128
    %276 = vxpose.xlu0.c.b16.cont [3/8] 0, 128
    %277 = vxpose.xlu0.c.b16.cont [4/8] 0, 128
    %278 = vxpose.xlu0.c.b16.cont [5/8] 0, 128
    %279 = vxpose.xlu0.c.b16.cont [6/8] 0, 128
    %280 = vxpose.xlu0.c.b16.cont [7/8] 0, 128
    %281 = vxpose.xlu0.c.b16.end [8/8] 0, 128
    %v282 = vpop.trf.xlu0
    %v283 = vpop.trf.xlu0
    %v284 = vpop.trf.xlu0
    %v285 = vpop.trf.xlu0
    %v286 = vpop.trf.xlu0
    %v287 = vpop.trf.xlu0
    %v288 = vpop.trf.xlu0
    %v289 = vpop.trf.xlu0
    %290 = vxpose.xlu0.c.b16.start [1/8] %v244, 128
    %291 = vxpose.xlu0.c.b16.cont [2/8] 0, 128
    %292 = vxpose.xlu0.c.b16.cont [3/8] 0, 128
    %293 = vxpose.xlu0.c.b16.cont [4/8] 0, 128
    %294 = vxpose.xlu0.c.b16.cont [5/8] 0, 128
    %295 = vxpose.xlu0.c.b16.cont [6/8] 0, 128
    %296 = vxpose.xlu0.c.b16.cont [7/8] 0, 128
    %297 = vxpose.xlu0.c.b16.end [8/8] 0, 128
    %v298 = vpop.trf.xlu0
    %v299 = vpop.trf.xlu0
    %v300 = vpop.trf.xlu0
    %v301 = vpop.trf.xlu0
    %v302 = vpop.trf.xlu0
    %v303 = vpop.trf.xlu0
    %v304 = vpop.trf.xlu0
    %v305 = vpop.trf.xlu0
    %306 = vxpose.xlu0.c.b16.start [1/8] %v245, 128
    %307 = vxpose.xlu0.c.b16.cont [2/8] 0, 128
    %308 = vxpose.xlu0.c.b16.cont [3/8] 0, 128
    %309 = vxpose.xlu0.c.b16.cont [4/8] 0, 128
    %310 = vxpose.xlu0.c.b16.cont [5/8] 0, 128
    %311 = vxpose.xlu0.c.b16.cont [6/8] 0, 128
    %312 = vxpose.xlu0.c.b16.cont [7/8] 0, 128
    %313 = vxpose.xlu0.c.b16.end [8/8] 0, 128
    %v314 = vpop.trf.xlu0
    %v315 = vpop.trf.xlu0
    %v316 = vpop.trf.xlu0
    %v317 = vpop.trf.xlu0
    %v318 = vpop.trf.xlu0
    %v319 = vpop.trf.xlu0
    %v320 = vpop.trf.xlu0
    %v321 = vpop.trf.xlu0
    %322 = vxpose.xlu0.c.b16.start [1/8] %v246, 128
    %323 = vxpose.xlu0.c.b16.cont [2/8] 0, 128
    %324 = vxpose.xlu0.c.b16.cont [3/8] 0, 128
    %325 = vxpose.xlu0.c.b16.cont [4/8] 0, 128
    %326 = vxpose.xlu0.c.b16.cont [5/8] 0, 128
    %327 = vxpose.xlu0.c.b16.cont [6/8] 0, 128
    %328 = vxpose.xlu0.c.b16.cont [7/8] 0, 128
    %329 = vxpose.xlu0.c.b16.end [8/8] 0, 128
    %v330 = vpop.trf.xlu0
    %v331 = vpop.trf.xlu0
    %v332 = vpop.trf.xlu0
    %v333 = vpop.trf.xlu0
    %v334 = vpop.trf.xlu0
    %v335 = vpop.trf.xlu0
    %v336 = vpop.trf.xlu0
    %v337 = vpop.trf.xlu0
    %338 = vxpose.xlu0.c.b16.start [1/8] %v247, 128
    %339 = vxpose.xlu0.c.b16.cont [2/8] 0, 128
    %340 = vxpose.xlu0.c.b16.cont [3/8] 0, 128
    %341 = vxpose.xlu0.c.b16.cont [4/8] 0, 128
    %342 = vxpose.xlu0.c.b16.cont [5/8] 0, 128
    %343 = vxpose.xlu0.c.b16.cont [6/8] 0, 128
    %344 = vxpose.xlu0.c.b16.cont [7/8] 0, 128
    %345 = vxpose.xlu0.c.b16.end [8/8] 0, 128
    %v346 = vpop.trf.xlu0
    %v347 = vpop.trf.xlu0
    %v348 = vpop.trf.xlu0
    %v349 = vpop.trf.xlu0
    %v350 = vpop.trf.xlu0
    %v351 = vpop.trf.xlu0
    %v352 = vpop.trf.xlu0
    %v353 = vpop.trf.xlu0
    %354 = vxpose.xlu0.c.b16.start [1/8] %v248, 128
    %355 = vxpose.xlu0.c.b16.cont [2/8] 0, 128
    %356 = vxpose.xlu0.c.b16.cont [3/8] 0, 128
    %357 = vxpose.xlu0.c.b16.cont [4/8] 0, 128
    %358 = vxpose.xlu0.c.b16.cont [5/8] 0, 128
    %359 = vxpose.xlu0.c.b16.cont [6/8] 0, 128
    %360 = vxpose.xlu0.c.b16.cont [7/8] 0, 128
    %361 = vxpose.xlu0.c.b16.end [8/8] 0, 128
    %v362 = vpop.trf.xlu0
    %v363 = vpop.trf.xlu0
    %v364 = vpop.trf.xlu0
    %v365 = vpop.trf.xlu0
    %v366 = vpop.trf.xlu0
    %v367 = vpop.trf.xlu0
    %v368 = vpop.trf.xlu0
    %v369 = vpop.trf.xlu0
    %370 = vxpose.xlu0.c.b16.start [1/8] %v249, 128
    %371 = vxpose.xlu0.c.b16.cont [2/8] 0, 128
    %372 = vxpose.xlu0.c.b16.cont [3/8] 0, 128
    %373 = vxpose.xlu0.c.b16.cont [4/8] 0, 128
    %374 = vxpose.xlu0.c.b16.cont [5/8] 0, 128
    %375 = vxpose.xlu0.c.b16.cont [6/8] 0, 128
    %376 = vxpose.xlu0.c.b16.cont [7/8] 0, 128
    %377 = vxpose.xlu0.c.b16.end [8/8] 0, 128
    %v378 = vpop.trf.xlu0
    %v379 = vpop.trf.xlu0
    %v380 = vpop.trf.xlu0
    %v381 = vpop.trf.xlu0
    %v382 = vpop.trf.xlu0
    %v383 = vpop.trf.xlu0
    %v384 = vpop.trf.xlu0
    %v385 = vpop.trf.xlu0
    %v386 = vld [vmem:[%s2] sm:$0xf]
    %v387 = vld [vmem:[%s2 + $0x4] sm:$0xf]
    %v396 = vunpack.c.l.b16 %v266
    %v397 = vunpack.c.l.b16 %v282
    %v398 = vunpack.c.l.b16 %v298
    %v399 = vunpack.c.l.b16 %v314
    %v400 = vunpack.c.l.b16 %v330
    %v401 = vunpack.c.l.b16 %v346
    %v402 = vunpack.c.l.b16 %v362
    %v403 = vunpack.c.l.b16 %v378
    %v404 = vpack.c.b16 %v397, %v396
    %v405 = vpack.c.b16 %v399, %v398
    %v406 = vpack.c.b16 %v401, %v400
    %v407 = vpack.c.b16 %v403, %v402
    %v410 = vunpack.c.l.b16 %v386
    %v411 = vunpack.c.l.b16 %v387
    %v412 = vpack.c.b16 %v411, %v410
    %v415 = vsel %vm120, %v404, 0
    %v418 = vsel %vm120, %v405, 0
    %v421 = vsel %vm120, %v406, 0
    %v424 = vsel %vm120, %v407, 0
    %426 = vmatpush.bf16.msra.mxu0 0
    %427 = vmatpush.bf16.msra.mxu0 0
    %428 = vmatpush.bf16.msra.mxu0 0
    %429 = vmatpush.bf16.msra.mxu0 0
    %430 = vmatpush.bf16.msra.mxu0 0
    %431 = vmatpush.bf16.msra.mxu0 0
    %432 = vmatpush.bf16.msra.mxu0 0
    %433 = vmatpush.bf16.msra.mxu0 %v412
    %434 = vmatmul.bf16.gmra.mxu0 %v415
    %v435 = vpop.f32.mrf.mxu0
    %v436 = vadd.f32 0.0, %v435
    %v437 = vpop.f32.mrf.mxu0
    %v438 = vadd.f32 0.0, %v437
    %439 = vmatmul.bf16.gmra.mxu0 %v418
    %v440 = vpop.f32.mrf.mxu0
    %v441 = vadd.f32 0.0, %v440
    %v442 = vpop.f32.mrf.mxu0
    %v443 = vadd.f32 0.0, %v442
    %444 = vmatmul.bf16.gmra.mxu0 %v421
    %v445 = vpop.f32.mrf.mxu0
    %v446 = vadd.f32 0.0, %v445
    %v447 = vpop.f32.mrf.mxu0
    %v448 = vadd.f32 0.0, %v447
    %449 = vmatmul.bf16.gmra.mxu0 %v424
    %v450 = vpop.f32.mrf.mxu0
    %v451 = vadd.f32 0.0, %v450
    %v452 = vpop.f32.mrf.mxu0
    %v453 = vadd.f32 0.0, %v452
    %454 = vdwg.mxu0
    %455 = vxpose.xlu0.b32.start [1/16] %v436, 128
    %456 = vxpose.xlu0.b32.cont [2/16] 0.0, 128
    %457 = vxpose.xlu0.b32.cont [3/16] 0.0, 128
    %458 = vxpose.xlu0.b32.cont [4/16] 0.0, 128
    %459 = vxpose.xlu0.b32.cont [5/16] 0.0, 128
    %460 = vxpose.xlu0.b32.cont [6/16] 0.0, 128
    %461 = vxpose.xlu0.b32.cont [7/16] 0.0, 128
    %462 = vxpose.xlu0.b32.cont [8/16] 0.0, 128
    %463 = vxpose.xlu0.b32.cont [9/16] 0.0, 128
    %464 = vxpose.xlu0.b32.cont [10/16] 0.0, 128
    %465 = vxpose.xlu0.b32.cont [11/16] 0.0, 128
    %466 = vxpose.xlu0.b32.cont [12/16] 0.0, 128
    %467 = vxpose.xlu0.b32.cont [13/16] 0.0, 128
    %468 = vxpose.xlu0.b32.cont [14/16] 0.0, 128
    %469 = vxpose.xlu0.b32.cont [15/16] 0.0, 128
    %470 = vxpose.xlu0.b32.end [16/16] 0.0, 128
    %v471 = vpop.trf.xlu0
    %v472 = vpop.trf.xlu0
    %v473 = vpop.trf.xlu0
    %v474 = vpop.trf.xlu0
    %v475 = vpop.trf.xlu0
    %v476 = vpop.trf.xlu0
    %v477 = vpop.trf.xlu0
    %v478 = vpop.trf.xlu0
    %v479 = vpop.trf.xlu0
    %v480 = vpop.trf.xlu0
    %v481 = vpop.trf.xlu0
    %v482 = vpop.trf.xlu0
    %v483 = vpop.trf.xlu0
    %v484 = vpop.trf.xlu0
    %v485 = vpop.trf.xlu0
    %v486 = vpop.trf.xlu0
    %487 = vxpose.xlu0.b32.start [1/16] %v438, 128
    %488 = vxpose.xlu0.b32.cont [2/16] 0.0, 128
    %489 = vxpose.xlu0.b32.cont [3/16] 0.0, 128
    %490 = vxpose.xlu0.b32.cont [4/16] 0.0, 128
    %491 = vxpose.xlu0.b32.cont [5/16] 0.0, 128
    %492 = vxpose.xlu0.b32.cont [6/16] 0.0, 128
    %493 = vxpose.xlu0.b32.cont [7/16] 0.0, 128
    %494 = vxpose.xlu0.b32.cont [8/16] 0.0, 128
    %495 = vxpose.xlu0.b32.cont [9/16] 0.0, 128
    %496 = vxpose.xlu0.b32.cont [10/16] 0.0, 128
    %497 = vxpose.xlu0.b32.cont [11/16] 0.0, 128
    %498 = vxpose.xlu0.b32.cont [12/16] 0.0, 128
    %499 = vxpose.xlu0.b32.cont [13/16] 0.0, 128
    %500 = vxpose.xlu0.b32.cont [14/16] 0.0, 128
    %501 = vxpose.xlu0.b32.cont [15/16] 0.0, 128
    %502 = vxpose.xlu0.b32.end [16/16] 0.0, 128
    %v503 = vpop.trf.xlu0
    %v504 = vpop.trf.xlu0
    %v505 = vpop.trf.xlu0
    %v506 = vpop.trf.xlu0
    %v507 = vpop.trf.xlu0
    %v508 = vpop.trf.xlu0
    %v509 = vpop.trf.xlu0
    %v510 = vpop.trf.xlu0
    %v511 = vpop.trf.xlu0
    %v512 = vpop.trf.xlu0
    %v513 = vpop.trf.xlu0
    %v514 = vpop.trf.xlu0
    %v515 = vpop.trf.xlu0
    %v516 = vpop.trf.xlu0
    %v517 = vpop.trf.xlu0
    %v518 = vpop.trf.xlu0
    %519 = vxpose.xlu0.b32.start [1/16] %v441, 128
    %520 = vxpose.xlu0.b32.cont [2/16] 0.0, 128
    %521 = vxpose.xlu0.b32.cont [3/16] 0.0, 128
    %522 = vxpose.xlu0.b32.cont [4/16] 0.0, 128
    %523 = vxpose.xlu0.b32.cont [5/16] 0.0, 128
    %524 = vxpose.xlu0.b32.cont [6/16] 0.0, 128
    %525 = vxpose.xlu0.b32.cont [7/16] 0.0, 128
    %526 = vxpose.xlu0.b32.cont [8/16] 0.0, 128
    %527 = vxpose.xlu0.b32.cont [9/16] 0.0, 128
    %528 = vxpose.xlu0.b32.cont [10/16] 0.0, 128
    %529 = vxpose.xlu0.b32.cont [11/16] 0.0, 128
    %530 = vxpose.xlu0.b32.cont [12/16] 0.0, 128
    %531 = vxpose.xlu0.b32.cont [13/16] 0.0, 128
    %532 = vxpose.xlu0.b32.cont [14/16] 0.0, 128
    %533 = vxpose.xlu0.b32.cont [15/16] 0.0, 128
    %534 = vxpose.xlu0.b32.end [16/16] 0.0, 128
    %v535 = vpop.trf.xlu0
    %v536 = vpop.trf.xlu0
    %v537 = vpop.trf.xlu0
    %v538 = vpop.trf.xlu0
    %v539 = vpop.trf.xlu0
    %v540 = vpop.trf.xlu0
    %v541 = vpop.trf.xlu0
    %v542 = vpop.trf.xlu0
    %v543 = vpop.trf.xlu0
    %v544 = vpop.trf.xlu0
    %v545 = vpop.trf.xlu0
    %v546 = vpop.trf.xlu0
    %v547 = vpop.trf.xlu0
    %v548 = vpop.trf.xlu0
    %v549 = vpop.trf.xlu0
    %v550 = vpop.trf.xlu0
    %551 = vxpose.xlu0.b32.start [1/16] %v443, 128
    %552 = vxpose.xlu0.b32.cont [2/16] 0.0, 128
    %553 = vxpose.xlu0.b32.cont [3/16] 0.0, 128
    %554 = vxpose.xlu0.b32.cont [4/16] 0.0, 128
    %555 = vxpose.xlu0.b32.cont [5/16] 0.0, 128
    %556 = vxpose.xlu0.b32.cont [6/16] 0.0, 128
    %557 = vxpose.xlu0.b32.cont [7/16] 0.0, 128
    %558 = vxpose.xlu0.b32.cont [8/16] 0.0, 128
    %559 = vxpose.xlu0.b32.cont [9/16] 0.0, 128
    %560 = vxpose.xlu0.b32.cont [10/16] 0.0, 128
    %561 = vxpose.xlu0.b32.cont [11/16] 0.0, 128
    %562 = vxpose.xlu0.b32.cont [12/16] 0.0, 128
    %563 = vxpose.xlu0.b32.cont [13/16] 0.0, 128
    %564 = vxpose.xlu0.b32.cont [14/16] 0.0, 128
    %565 = vxpose.xlu0.b32.cont [15/16] 0.0, 128
    %566 = vxpose.xlu0.b32.end [16/16] 0.0, 128
    %v567 = vpop.trf.xlu0
    %v568 = vpop.trf.xlu0
    %v569 = vpop.trf.xlu0
    %v570 = vpop.trf.xlu0
    %v571 = vpop.trf.xlu0
    %v572 = vpop.trf.xlu0
    %v573 = vpop.trf.xlu0
    %v574 = vpop.trf.xlu0
    %v575 = vpop.trf.xlu0
    %v576 = vpop.trf.xlu0
    %v577 = vpop.trf.xlu0
    %v578 = vpop.trf.xlu0
    %v579 = vpop.trf.xlu0
    %v580 = vpop.trf.xlu0
    %v581 = vpop.trf.xlu0
    %v582 = vpop.trf.xlu0
    %583 = vxpose.xlu0.b32.start [1/16] %v446, 128
    %584 = vxpose.xlu0.b32.cont [2/16] 0.0, 128
    %585 = vxpose.xlu0.b32.cont [3/16] 0.0, 128
    %586 = vxpose.xlu0.b32.cont [4/16] 0.0, 128
    %587 = vxpose.xlu0.b32.cont [5/16] 0.0, 128
    %588 = vxpose.xlu0.b32.cont [6/16] 0.0, 128
    %589 = vxpose.xlu0.b32.cont [7/16] 0.0, 128
    %590 = vxpose.xlu0.b32.cont [8/16] 0.0, 128
    %591 = vxpose.xlu0.b32.cont [9/16] 0.0, 128
    %592 = vxpose.xlu0.b32.cont [10/16] 0.0, 128
    %593 = vxpose.xlu0.b32.cont [11/16] 0.0, 128
    %594 = vxpose.xlu0.b32.cont [12/16] 0.0, 128
    %595 = vxpose.xlu0.b32.cont [13/16] 0.0, 128
    %596 = vxpose.xlu0.b32.cont [14/16] 0.0, 128
    %597 = vxpose.xlu0.b32.cont [15/16] 0.0, 128
    %598 = vxpose.xlu0.b32.end [16/16] 0.0, 128
    %v599 = vpop.trf.xlu0
    %v600 = vpop.trf.xlu0
    %v601 = vpop.trf.xlu0
    %v602 = vpop.trf.xlu0
    %v603 = vpop.trf.xlu0
    %v604 = vpop.trf.xlu0
    %v605 = vpop.trf.xlu0
    %v606 = vpop.trf.xlu0
    %v607 = vpop.trf.xlu0
    %v608 = vpop.trf.xlu0
    %v609 = vpop.trf.xlu0
    %v610 = vpop.trf.xlu0
    %v611 = vpop.trf.xlu0
    %v612 = vpop.trf.xlu0
    %v613 = vpop.trf.xlu0
    %v614 = vpop.trf.xlu0
    %615 = vxpose.xlu0.b32.start [1/16] %v448, 128
    %616 = vxpose.xlu0.b32.cont [2/16] 0.0, 128
    %617 = vxpose.xlu0.b32.cont [3/16] 0.0, 128
    %618 = vxpose.xlu0.b32.cont [4/16] 0.0, 128
    %619 = vxpose.xlu0.b32.cont [5/16] 0.0, 128
    %620 = vxpose.xlu0.b32.cont [6/16] 0.0, 128
    %621 = vxpose.xlu0.b32.cont [7/16] 0.0, 128
    %622 = vxpose.xlu0.b32.cont [8/16] 0.0, 128
    %623 = vxpose.xlu0.b32.cont [9/16] 0.0, 128
    %624 = vxpose.xlu0.b32.cont [10/16] 0.0, 128
    %625 = vxpose.xlu0.b32.cont [11/16] 0.0, 128
    %626 = vxpose.xlu0.b32.cont [12/16] 0.0, 128
    %627 = vxpose.xlu0.b32.cont [13/16] 0.0, 128
    %628 = vxpose.xlu0.b32.cont [14/16] 0.0, 128
    %629 = vxpose.xlu0.b32.cont [15/16] 0.0, 128
    %630 = vxpose.xlu0.b32.end [16/16] 0.0, 128
    %v631 = vpop.trf.xlu0
    %v632 = vpop.trf.xlu0
    %v633 = vpop.trf.xlu0
    %v634 = vpop.trf.xlu0
    %v635 = vpop.trf.xlu0
    %v636 = vpop.trf.xlu0
    %v637 = vpop.trf.xlu0
    %v638 = vpop.trf.xlu0
    %v639 = vpop.trf.xlu0
    %v640 = vpop.trf.xlu0
    %v641 = vpop.trf.xlu0
    %v642 = vpop.trf.xlu0
    %v643 = vpop.trf.xlu0
    %v644 = vpop.trf.xlu0
    %v645 = vpop.trf.xlu0
    %v646 = vpop.trf.xlu0
    %647 = vxpose.xlu0.b32.start [1/16] %v451, 128
    %648 = vxpose.xlu0.b32.cont [2/16] 0.0, 128
    %649 = vxpose.xlu0.b32.cont [3/16] 0.0, 128
    %650 = vxpose.xlu0.b32.cont [4/16] 0.0, 128
    %651 = vxpose.xlu0.b32.cont [5/16] 0.0, 128
    %652 = vxpose.xlu0.b32.cont [6/16] 0.0, 128
    %653 = vxpose.xlu0.b32.cont [7/16] 0.0, 128
    %654 = vxpose.xlu0.b32.cont [8/16] 0.0, 128
    %655 = vxpose.xlu0.b32.cont [9/16] 0.0, 128
    %656 = vxpose.xlu0.b32.cont [10/16] 0.0, 128
    %657 = vxpose.xlu0.b32.cont [11/16] 0.0, 128
    %658 = vxpose.xlu0.b32.cont [12/16] 0.0, 128
    %659 = vxpose.xlu0.b32.cont [13/16] 0.0, 128
    %660 = vxpose.xlu0.b32.cont [14/16] 0.0, 128
    %661 = vxpose.xlu0.b32.cont [15/16] 0.0, 128
    %662 = vxpose.xlu0.b32.end [16/16] 0.0, 128
    %v663 = vpop.trf.xlu0
    %v664 = vpop.trf.xlu0
    %v665 = vpop.trf.xlu0
    %v666 = vpop.trf.xlu0
    %v667 = vpop.trf.xlu0
    %v668 = vpop.trf.xlu0
    %v669 = vpop.trf.xlu0
    %v670 = vpop.trf.xlu0
    %v671 = vpop.trf.xlu0
    %v672 = vpop.trf.xlu0
    %v673 = vpop.trf.xlu0
    %v674 = vpop.trf.xlu0
    %v675 = vpop.trf.xlu0
    %v676 = vpop.trf.xlu0
    %v677 = vpop.trf.xlu0
    %v678 = vpop.trf.xlu0
    %679 = vxpose.xlu0.b32.start [1/16] %v453, 128
    %680 = vxpose.xlu0.b32.cont [2/16] 0.0, 128
    %681 = vxpose.xlu0.b32.cont [3/16] 0.0, 128
    %682 = vxpose.xlu0.b32.cont [4/16] 0.0, 128
    %683 = vxpose.xlu0.b32.cont [5/16] 0.0, 128
    %684 = vxpose.xlu0.b32.cont [6/16] 0.0, 128
    %685 = vxpose.xlu0.b32.cont [7/16] 0.0, 128
    %686 = vxpose.xlu0.b32.cont [8/16] 0.0, 128
    %687 = vxpose.xlu0.b32.cont [9/16] 0.0, 128
    %688 = vxpose.xlu0.b32.cont [10/16] 0.0, 128
    %689 = vxpose.xlu0.b32.cont [11/16] 0.0, 128
    %690 = vxpose.xlu0.b32.cont [12/16] 0.0, 128
    %691 = vxpose.xlu0.b32.cont [13/16] 0.0, 128
    %692 = vxpose.xlu0.b32.cont [14/16] 0.0, 128
    %693 = vxpose.xlu0.b32.cont [15/16] 0.0, 128
    %694 = vxpose.xlu0.b32.end [16/16] 0.0, 128
    %v695 = vpop.trf.xlu0
    %v696 = vpop.trf.xlu0
    %v697 = vpop.trf.xlu0
    %v698 = vpop.trf.xlu0
    %v699 = vpop.trf.xlu0
    %v700 = vpop.trf.xlu0
    %v701 = vpop.trf.xlu0
    %v702 = vpop.trf.xlu0
    %v703 = vpop.trf.xlu0
    %v704 = vpop.trf.xlu0
    %v705 = vpop.trf.xlu0
    %v706 = vpop.trf.xlu0
    %v707 = vpop.trf.xlu0
    %v708 = vpop.trf.xlu0
    %v709 = vpop.trf.xlu0
    %v710 = vpop.trf.xlu0
    %vm711 = vcmask 64512
    %712 = vst.msk [vmem:[#allocation5] sm:$0xff] %vm711, %v471
    %713 = vst.msk [vmem:[#allocation5 + $0x8] sm:$0xff] %vm711, %v503
    %714 = vst.msk [vmem:[#allocation5 + $0x10] sm:$0xff] %vm711, %v535
    %715 = vst.msk [vmem:[#allocation5 + $0x18] sm:$0xff] %vm711, %v567
    %716 = vst.msk [vmem:[#allocation5 + $0x20] sm:$0xff] %vm711, %v599
    %717 = vst.msk [vmem:[#allocation5 + $0x28] sm:$0xff] %vm711, %v631
    %718 = vst.msk [vmem:[#allocation5 + $0x30] sm:$0xff] %vm711, %v663
    %719 = vst.msk [vmem:[#allocation5 + $0x38] sm:$0xff] %vm711, %v695
    %v720 = vld [vmem:[%s3] sm:$0xf]
    %v721 = vld [vmem:[%s3 + $0x4] sm:$0xf]
    %v724 = vunpack.c.l.b16 %v720
    %v725 = vunpack.c.l.b16 %v721
    %v726 = vpack.c.b16 %v725, %v724
    %728 = vmatpush.bf16.msra.mxu0 0
    %729 = vmatpush.bf16.msra.mxu0 0
    %730 = vmatpush.bf16.msra.mxu0 0
    %731 = vmatpush.bf16.msra.mxu0 0
    %732 = vmatpush.bf16.msra.mxu0 0
    %733 = vmatpush.bf16.msra.mxu0 0
    %734 = vmatpush.bf16.msra.mxu0 0
    %735 = vmatpush.bf16.msra.mxu0 %v726
    %736 = vmatmul.bf16.gmra.mxu0 %v122
    %v737 = vpop.f32.mrf.mxu0
    %v738 = vadd.f32 0.0, %v737
    %v739 = vpop.f32.mrf.mxu0
    %v740 = vadd.f32 0.0, %v739
    %741 = vmatmul.bf16.gmra.mxu0 %v125
    %v742 = vpop.f32.mrf.mxu0
    %v743 = vadd.f32 0.0, %v742
    %v744 = vpop.f32.mrf.mxu0
    %v745 = vadd.f32 0.0, %v744
    %746 = vmatmul.bf16.gmra.mxu0 %v128
    %v747 = vpop.f32.mrf.mxu0
    %v748 = vadd.f32 0.0, %v747
    %v749 = vpop.f32.mrf.mxu0
    %v750 = vadd.f32 0.0, %v749
    %751 = vmatmul.bf16.gmra.mxu0 %v131
    %v752 = vpop.f32.mrf.mxu0
    %v753 = vadd.f32 0.0, %v752
    %v754 = vpop.f32.mrf.mxu0
    %v755 = vadd.f32 0.0, %v754
    %756 = vmatmul.bf16.gmra.mxu0 %v134
    %v757 = vpop.f32.mrf.mxu0
    %v758 = vadd.f32 0.0, %v757
    %v759 = vpop.f32.mrf.mxu0
    %v760 = vadd.f32 0.0, %v759
    %761 = vmatmul.bf16.gmra.mxu0 %v137
    %v762 = vpop.f32.mrf.mxu0
    %v763 = vadd.f32 0.0, %v762
    %v764 = vpop.f32.mrf.mxu0
    %v765 = vadd.f32 0.0, %v764
    %766 = vmatmul.bf16.gmra.mxu0 %v140
    %v767 = vpop.f32.mrf.mxu0
    %v768 = vadd.f32 0.0, %v767
    %v769 = vpop.f32.mrf.mxu0
    %v770 = vadd.f32 0.0, %v769
    %771 = vmatmul.bf16.gmra.mxu0 %v143
    %v772 = vpop.f32.mrf.mxu0
    %v773 = vadd.f32 0.0, %v772
    %v774 = vpop.f32.mrf.mxu0
    %v775 = vadd.f32 0.0, %v774
    %776 = vdwg.mxu0
    %v777 = vpack.c.bf16 %v738, %v738
    %v778 = vpack.c.bf16 %v740, %v740
    %v779 = vpack.c.bf16 %v743, %v743
    %v780 = vpack.c.bf16 %v745, %v745
    %v781 = vpack.c.bf16 %v748, %v748
    %v782 = vpack.c.bf16 %v750, %v750
    %v783 = vpack.c.bf16 %v753, %v753
    %v784 = vpack.c.bf16 %v755, %v755
    %v785 = vpack.c.bf16 %v758, %v758
    %v786 = vpack.c.bf16 %v760, %v760
    %v787 = vpack.c.bf16 %v763, %v763
    %v788 = vpack.c.bf16 %v765, %v765
    %v789 = vpack.c.bf16 %v768, %v768
    %v790 = vpack.c.bf16 %v770, %v770
    %v791 = vpack.c.bf16 %v773, %v773
    %v792 = vpack.c.bf16 %v775, %v775
    %v809 = vunpack.c.l.b16 %v777
    %v810 = vunpack.c.l.b16 %v778
    %v811 = vunpack.c.l.b16 %v779
    %v812 = vunpack.c.l.b16 %v780
    %v813 = vunpack.c.l.b16 %v781
    %v814 = vunpack.c.l.b16 %v782
    %v815 = vunpack.c.l.b16 %v783
    %v816 = vunpack.c.l.b16 %v784
    %v817 = vunpack.c.l.b16 %v785
    %v818 = vunpack.c.l.b16 %v786
    %v819 = vunpack.c.l.b16 %v787
    %v820 = vunpack.c.l.b16 %v788
    %v821 = vunpack.c.l.b16 %v789
    %v822 = vunpack.c.l.b16 %v790
    %v823 = vunpack.c.l.b16 %v791
    %v824 = vunpack.c.l.b16 %v792
    %v825 = vpack.c.b16 %v810, %v809
    %v826 = vpack.c.b16 %v812, %v811
    %v827 = vpack.c.b16 %v814, %v813
    %v828 = vpack.c.b16 %v816, %v815
    %v829 = vpack.c.b16 %v818, %v817
    %v830 = vpack.c.b16 %v820, %v819
    %v831 = vpack.c.b16 %v822, %v821
    %v832 = vpack.c.b16 %v824, %v823
    %841 = vxpose.xlu0.c.b16.start [1/8] %v825, 128
    %842 = vxpose.xlu0.c.b16.cont [2/8] 0, 128
    %843 = vxpose.xlu0.c.b16.cont [3/8] 0, 128
    %844 = vxpose.xlu0.c.b16.cont [4/8] 0, 128
    %845 = vxpose.xlu0.c.b16.cont [5/8] 0, 128
    %846 = vxpose.xlu0.c.b16.cont [6/8] 0, 128
    %847 = vxpose.xlu0.c.b16.cont [7/8] 0, 128
    %848 = vxpose.xlu0.c.b16.end [8/8] 0, 128
    %v849 = vpop.trf.xlu0
    %v850 = vpop.trf.xlu0
    %v851 = vpop.trf.xlu0
    %v852 = vpop.trf.xlu0
    %v853 = vpop.trf.xlu0
    %v854 = vpop.trf.xlu0
    %v855 = vpop.trf.xlu0
    %v856 = vpop.trf.xlu0
    %857 = vxpose.xlu0.c.b16.start [1/8] %v826, 128
    %858 = vxpose.xlu0.c.b16.cont [2/8] 0, 128
    %859 = vxpose.xlu0.c.b16.cont [3/8] 0, 128
    %860 = vxpose.xlu0.c.b16.cont [4/8] 0, 128
    %861 = vxpose.xlu0.c.b16.cont [5/8] 0, 128
    %862 = vxpose.xlu0.c.b16.cont [6/8] 0, 128
    %863 = vxpose.xlu0.c.b16.cont [7/8] 0, 128
    %864 = vxpose.xlu0.c.b16.end [8/8] 0, 128
    %v865 = vpop.trf.xlu0
    %v866 = vpop.trf.xlu0
    %v867 = vpop.trf.xlu0
    %v868 = vpop.trf.xlu0
    %v869 = vpop.trf.xlu0
    %v870 = vpop.trf.xlu0
    %v871 = vpop.trf.xlu0
    %v872 = vpop.trf.xlu0
    %873 = vxpose.xlu0.c.b16.start [1/8] %v827, 128
    %874 = vxpose.xlu0.c.b16.cont [2/8] 0, 128
    %875 = vxpose.xlu0.c.b16.cont [3/8] 0, 128
    %876 = vxpose.xlu0.c.b16.cont [4/8] 0, 128
    %877 = vxpose.xlu0.c.b16.cont [5/8] 0, 128
    %878 = vxpose.xlu0.c.b16.cont [6/8] 0, 128
    %879 = vxpose.xlu0.c.b16.cont [7/8] 0, 128
    %880 = vxpose.xlu0.c.b16.end [8/8] 0, 128
    %v881 = vpop.trf.xlu0
    %v882 = vpop.trf.xlu0
    %v883 = vpop.trf.xlu0
    %v884 = vpop.trf.xlu0
    %v885 = vpop.trf.xlu0
    %v886 = vpop.trf.xlu0
    %v887 = vpop.trf.xlu0
    %v888 = vpop.trf.xlu0
    %889 = vxpose.xlu0.c.b16.start [1/8] %v828, 128
    %890 = vxpose.xlu0.c.b16.cont [2/8] 0, 128
    %891 = vxpose.xlu0.c.b16.cont [3/8] 0, 128
    %892 = vxpose.xlu0.c.b16.cont [4/8] 0, 128
    %893 = vxpose.xlu0.c.b16.cont [5/8] 0, 128
    %894 = vxpose.xlu0.c.b16.cont [6/8] 0, 128
    %895 = vxpose.xlu0.c.b16.cont [7/8] 0, 128
    %896 = vxpose.xlu0.c.b16.end [8/8] 0, 128
    %v897 = vpop.trf.xlu0
    %v898 = vpop.trf.xlu0
    %v899 = vpop.trf.xlu0
    %v900 = vpop.trf.xlu0
    %v901 = vpop.trf.xlu0
    %v902 = vpop.trf.xlu0
    %v903 = vpop.trf.xlu0
    %v904 = vpop.trf.xlu0
    %905 = vxpose.xlu0.c.b16.start [1/8] %v829, 128
    %906 = vxpose.xlu0.c.b16.cont [2/8] 0, 128
    %907 = vxpose.xlu0.c.b16.cont [3/8] 0, 128
    %908 = vxpose.xlu0.c.b16.cont [4/8] 0, 128
    %909 = vxpose.xlu0.c.b16.cont [5/8] 0, 128
    %910 = vxpose.xlu0.c.b16.cont [6/8] 0, 128
    %911 = vxpose.xlu0.c.b16.cont [7/8] 0, 128
    %912 = vxpose.xlu0.c.b16.end [8/8] 0, 128
    %v913 = vpop.trf.xlu0
    %v914 = vpop.trf.xlu0
    %v915 = vpop.trf.xlu0
    %v916 = vpop.trf.xlu0
    %v917 = vpop.trf.xlu0
    %v918 = vpop.trf.xlu0
    %v919 = vpop.trf.xlu0
    %v920 = vpop.trf.xlu0
    %921 = vxpose.xlu0.c.b16.start [1/8] %v830, 128
    %922 = vxpose.xlu0.c.b16.cont [2/8] 0, 128
    %923 = vxpose.xlu0.c.b16.cont [3/8] 0, 128
    %924 = vxpose.xlu0.c.b16.cont [4/8] 0, 128
    %925 = vxpose.xlu0.c.b16.cont [5/8] 0, 128
    %926 = vxpose.xlu0.c.b16.cont [6/8] 0, 128
    %927 = vxpose.xlu0.c.b16.cont [7/8] 0, 128
    %928 = vxpose.xlu0.c.b16.end [8/8] 0, 128
    %v929 = vpop.trf.xlu0
    %v930 = vpop.trf.xlu0
    %v931 = vpop.trf.xlu0
    %v932 = vpop.trf.xlu0
    %v933 = vpop.trf.xlu0
    %v934 = vpop.trf.xlu0
    %v935 = vpop.trf.xlu0
    %v936 = vpop.trf.xlu0
    %937 = vxpose.xlu0.c.b16.start [1/8] %v831, 128
    %938 = vxpose.xlu0.c.b16.cont [2/8] 0, 128
    %939 = vxpose.xlu0.c.b16.cont [3/8] 0, 128
    %940 = vxpose.xlu0.c.b16.cont [4/8] 0, 128
    %941 = vxpose.xlu0.c.b16.cont [5/8] 0, 128
    %942 = vxpose.xlu0.c.b16.cont [6/8] 0, 128
    %943 = vxpose.xlu0.c.b16.cont [7/8] 0, 128
    %944 = vxpose.xlu0.c.b16.end [8/8] 0, 128
    %v945 = vpop.trf.xlu0
    %v946 = vpop.trf.xlu0
    %v947 = vpop.trf.xlu0
    %v948 = vpop.trf.xlu0
    %v949 = vpop.trf.xlu0
    %v950 = vpop.trf.xlu0
    %v951 = vpop.trf.xlu0
    %v952 = vpop.trf.xlu0
    %953 = vxpose.xlu0.c.b16.start [1/8] %v832, 128
    %954 = vxpose.xlu0.c.b16.cont [2/8] 0, 128
    %955 = vxpose.xlu0.c.b16.cont [3/8] 0, 128
    %956 = vxpose.xlu0.c.b16.cont [4/8] 0, 128
    %957 = vxpose.xlu0.c.b16.cont [5/8] 0, 128
    %958 = vxpose.xlu0.c.b16.cont [6/8] 0, 128
    %959 = vxpose.xlu0.c.b16.cont [7/8] 0, 128
    %960 = vxpose.xlu0.c.b16.end [8/8] 0, 128
    %v961 = vpop.trf.xlu0
    %v962 = vpop.trf.xlu0
    %v963 = vpop.trf.xlu0
    %v964 = vpop.trf.xlu0
    %v965 = vpop.trf.xlu0
    %v966 = vpop.trf.xlu0
    %v967 = vpop.trf.xlu0
    %v968 = vpop.trf.xlu0
    %v969 = vld [vmem:[%s4] sm:$0xf]
    %v970 = vld [vmem:[%s4 + $0x4] sm:$0xf]
    %972 = vst [vmem:[#allocation1] ss:$4 sm:$0xff] %v849
    %s974 = scalar_lea.vmem [#allocation1], 1
    %975 = vst [vmem:[%s974] ss:$4 sm:$0xff] %v865
    %s977 = scalar_lea.vmem [#allocation1], 2
    %978 = vst [vmem:[%s977] ss:$4 sm:$0xff] %v881
    %s980 = scalar_lea.vmem [#allocation1], 3
    %981 = vst [vmem:[%s980] ss:$4 sm:$0xff] %v897
    %s983 = scalar_lea.vmem [#allocation1], 32
    %984 = vst [vmem:[%s983] ss:$4 sm:$0xff] %v913
    %s986 = scalar_lea.vmem [#allocation1], 33
    %987 = vst [vmem:[%s986] ss:$4 sm:$0xff] %v929
    %s989 = scalar_lea.vmem [#allocation1], 34
    %990 = vst [vmem:[%s989] ss:$4 sm:$0xff] %v945
    %s992 = scalar_lea.vmem [#allocation1], 35
    %993 = vst [vmem:[%s992] ss:$4 sm:$0xff] %v961
    %v994 = vld.sshfl [vmem:[#allocation1] sm:$0xff pattern:$0x73625140]
    %v995 = vld.sshfl [vmem:[#allocation1 + $0x20] sm:$0xff pattern:$0x73625140]
    %v998 = vunpack.c.l.b16 %v969
    %v999 = vunpack.c.l.b16 %v970
    %v1000 = vpack.c.b16 %v999, %v998
    %v1002 = vsel %vm120, %v994, 0
    %v1004 = vsel %vm120, %v995, 0
    %1006 = vmatpush.bf16.msra.mxu0 0
    %1007 = vmatpush.bf16.msra.mxu0 0
    %1008 = vmatpush.bf16.msra.mxu0 0
    %1009 = vmatpush.bf16.msra.mxu0 0
    %1010 = vmatpush.bf16.msra.mxu0 0
    %1011 = vmatpush.bf16.msra.mxu0 0
    %1012 = vmatpush.bf16.msra.mxu0 0
    %1013 = vmatpush.bf16.msra.mxu0 %v1000
    %1014 = vmatmul.bf16.gmra.mxu0 %v1002
    %v1015 = vpop.f32.mrf.mxu0
    %v1016 = vadd.f32 0.0, %v1015
    %v1017 = vpop.f32.mrf.mxu0
    %v1018 = vadd.f32 0.0, %v1017
    %1019 = vmatmul.bf16.gmra.mxu0 %v1004
    %v1020 = vpop.f32.mrf.mxu0
    %v1021 = vadd.f32 0.0, %v1020
    %v1022 = vpop.f32.mrf.mxu0
    %v1023 = vadd.f32 0.0, %v1022
    %1024 = vdwg.mxu0
    %v1029 = vrot.slane %v1016, 4
    %v1030 = vrot.slane %v1018, 4
    %v1031 = vrot.slane %v1021, 4
    %v1032 = vrot.slane %v1023, 4
    %1037 = vxpose.xlu0.b32.start [1/16] %v1016, 128
    %1038 = vxpose.xlu0.b32.cont [2/16] 0.0, 128
    %1039 = vxpose.xlu0.b32.cont [3/16] 0.0, 128
    %1040 = vxpose.xlu0.b32.cont [4/16] 0.0, 128
    %1041 = vxpose.xlu0.b32.cont [5/16] 0.0, 128
    %1042 = vxpose.xlu0.b32.cont [6/16] 0.0, 128
    %1043 = vxpose.xlu0.b32.cont [7/16] 0.0, 128
    %1044 = vxpose.xlu0.b32.cont [8/16] 0.0, 128
    %1045 = vxpose.xlu0.b32.cont [9/16] 0.0, 128
    %1046 = vxpose.xlu0.b32.cont [10/16] 0.0, 128
    %1047 = vxpose.xlu0.b32.cont [11/16] 0.0, 128
    %1048 = vxpose.xlu0.b32.cont [12/16] 0.0, 128
    %1049 = vxpose.xlu0.b32.cont [13/16] 0.0, 128
    %1050 = vxpose.xlu0.b32.cont [14/16] 0.0, 128
    %1051 = vxpose.xlu0.b32.cont [15/16] 0.0, 128
    %1052 = vxpose.xlu0.b32.end [16/16] 0.0, 128
    %v1053 = vpop.trf.xlu0
    %v1054 = vpop.trf.xlu0
    %v1055 = vpop.trf.xlu0
    %v1056 = vpop.trf.xlu0
    %v1057 = vpop.trf.xlu0
    %v1058 = vpop.trf.xlu0
    %v1059 = vpop.trf.xlu0
    %v1060 = vpop.trf.xlu0
    %v1061 = vpop.trf.xlu0
    %v1062 = vpop.trf.xlu0
    %v1063 = vpop.trf.xlu0
    %v1064 = vpop.trf.xlu0
    %v1065 = vpop.trf.xlu0
    %v1066 = vpop.trf.xlu0
    %v1067 = vpop.trf.xlu0
    %v1068 = vpop.trf.xlu0
    %1069 = vxpose.xlu0.b32.start [1/16] %v1029, 128
    %1070 = vxpose.xlu0.b32.cont [2/16] 0.0, 128
    %1071 = vxpose.xlu0.b32.cont [3/16] 0.0, 128
    %1072 = vxpose.xlu0.b32.cont [4/16] 0.0, 128
    %1073 = vxpose.xlu0.b32.cont [5/16] 0.0, 128
    %1074 = vxpose.xlu0.b32.cont [6/16] 0.0, 128
    %1075 = vxpose.xlu0.b32.cont [7/16] 0.0, 128
    %1076 = vxpose.xlu0.b32.cont [8/16] 0.0, 128
    %1077 = vxpose.xlu0.b32.cont [9/16] 0.0, 128
    %1078 = vxpose.xlu0.b32.cont [10/16] 0.0, 128
    %1079 = vxpose.xlu0.b32.cont [11/16] 0.0, 128
    %1080 = vxpose.xlu0.b32.cont [12/16] 0.0, 128
    %1081 = vxpose.xlu0.b32.cont [13/16] 0.0, 128
    %1082 = vxpose.xlu0.b32.cont [14/16] 0.0, 128
    %1083 = vxpose.xlu0.b32.cont [15/16] 0.0, 128
    %1084 = vxpose.xlu0.b32.end [16/16] 0.0, 128
    %v1085 = vpop.trf.xlu0
    %v1086 = vpop.trf.xlu0
    %v1087 = vpop.trf.xlu0
    %v1088 = vpop.trf.xlu0
    %v1089 = vpop.trf.xlu0
    %v1090 = vpop.trf.xlu0
    %v1091 = vpop.trf.xlu0
    %v1092 = vpop.trf.xlu0
    %v1093 = vpop.trf.xlu0
    %v1094 = vpop.trf.xlu0
    %v1095 = vpop.trf.xlu0
    %v1096 = vpop.trf.xlu0
    %v1097 = vpop.trf.xlu0
    %v1098 = vpop.trf.xlu0
    %v1099 = vpop.trf.xlu0
    %v1100 = vpop.trf.xlu0
    %1101 = vxpose.xlu0.b32.start [1/16] %v1018, 128
    %1102 = vxpose.xlu0.b32.cont [2/16] 0.0, 128
    %1103 = vxpose.xlu0.b32.cont [3/16] 0.0, 128
    %1104 = vxpose.xlu0.b32.cont [4/16] 0.0, 128
    %1105 = vxpose.xlu0.b32.cont [5/16] 0.0, 128
    %1106 = vxpose.xlu0.b32.cont [6/16] 0.0, 128
    %1107 = vxpose.xlu0.b32.cont [7/16] 0.0, 128
    %1108 = vxpose.xlu0.b32.cont [8/16] 0.0, 128
    %1109 = vxpose.xlu0.b32.cont [9/16] 0.0, 128
    %1110 = vxpose.xlu0.b32.cont [10/16] 0.0, 128
    %1111 = vxpose.xlu0.b32.cont [11/16] 0.0, 128
    %1112 = vxpose.xlu0.b32.cont [12/16] 0.0, 128
    %1113 = vxpose.xlu0.b32.cont [13/16] 0.0, 128
    %1114 = vxpose.xlu0.b32.cont [14/16] 0.0, 128
    %1115 = vxpose.xlu0.b32.cont [15/16] 0.0, 128
    %1116 = vxpose.xlu0.b32.end [16/16] 0.0, 128
    %v1117 = vpop.trf.xlu0
    %v1118 = vpop.trf.xlu0
    %v1119 = vpop.trf.xlu0
    %v1120 = vpop.trf.xlu0
    %v1121 = vpop.trf.xlu0
    %v1122 = vpop.trf.xlu0
    %v1123 = vpop.trf.xlu0
    %v1124 = vpop.trf.xlu0
    %v1125 = vpop.trf.xlu0
    %v1126 = vpop.trf.xlu0
    %v1127 = vpop.trf.xlu0
    %v1128 = vpop.trf.xlu0
    %v1129 = vpop.trf.xlu0
    %v1130 = vpop.trf.xlu0
    %v1131 = vpop.trf.xlu0
    %v1132 = vpop.trf.xlu0
    %1133 = vxpose.xlu0.b32.start [1/16] %v1030, 128
    %1134 = vxpose.xlu0.b32.cont [2/16] 0.0, 128
    %1135 = vxpose.xlu0.b32.cont [3/16] 0.0, 128
    %1136 = vxpose.xlu0.b32.cont [4/16] 0.0, 128
    %1137 = vxpose.xlu0.b32.cont [5/16] 0.0, 128
    %1138 = vxpose.xlu0.b32.cont [6/16] 0.0, 128
    %1139 = vxpose.xlu0.b32.cont [7/16] 0.0, 128
    %1140 = vxpose.xlu0.b32.cont [8/16] 0.0, 128
    %1141 = vxpose.xlu0.b32.cont [9/16] 0.0, 128
    %1142 = vxpose.xlu0.b32.cont [10/16] 0.0, 128
    %1143 = vxpose.xlu0.b32.cont [11/16] 0.0, 128
    %1144 = vxpose.xlu0.b32.cont [12/16] 0.0, 128
    %1145 = vxpose.xlu0.b32.cont [13/16] 0.0, 128
    %1146 = vxpose.xlu0.b32.cont [14/16] 0.0, 128
    %1147 = vxpose.xlu0.b32.cont [15/16] 0.0, 128
    %1148 = vxpose.xlu0.b32.end [16/16] 0.0, 128
    %v1149 = vpop.trf.xlu0
    %v1150 = vpop.trf.xlu0
    %v1151 = vpop.trf.xlu0
    %v1152 = vpop.trf.xlu0
    %v1153 = vpop.trf.xlu0
    %v1154 = vpop.trf.xlu0
    %v1155 = vpop.trf.xlu0
    %v1156 = vpop.trf.xlu0
    %v1157 = vpop.trf.xlu0
    %v1158 = vpop.trf.xlu0
    %v1159 = vpop.trf.xlu0
    %v1160 = vpop.trf.xlu0
    %v1161 = vpop.trf.xlu0
    %v1162 = vpop.trf.xlu0
    %v1163 = vpop.trf.xlu0
    %v1164 = vpop.trf.xlu0
    %1165 = vxpose.xlu0.b32.start [1/16] %v1021, 128
    %1166 = vxpose.xlu0.b32.cont [2/16] 0.0, 128
    %1167 = vxpose.xlu0.b32.cont [3/16] 0.0, 128
    %1168 = vxpose.xlu0.b32.cont [4/16] 0.0, 128
    %1169 = vxpose.xlu0.b32.cont [5/16] 0.0, 128
    %1170 = vxpose.xlu0.b32.cont [6/16] 0.0, 128
    %1171 = vxpose.xlu0.b32.cont [7/16] 0.0, 128
    %1172 = vxpose.xlu0.b32.cont [8/16] 0.0, 128
    %1173 = vxpose.xlu0.b32.cont [9/16] 0.0, 128
    %1174 = vxpose.xlu0.b32.cont [10/16] 0.0, 128
    %1175 = vxpose.xlu0.b32.cont [11/16] 0.0, 128
    %1176 = vxpose.xlu0.b32.cont [12/16] 0.0, 128
    %1177 = vxpose.xlu0.b32.cont [13/16] 0.0, 128
    %1178 = vxpose.xlu0.b32.cont [14/16] 0.0, 128
    %1179 = vxpose.xlu0.b32.cont [15/16] 0.0, 128
    %1180 = vxpose.xlu0.b32.end [16/16] 0.0, 128
    %v1181 = vpop.trf.xlu0
    %v1182 = vpop.trf.xlu0
    %v1183 = vpop.trf.xlu0
    %v1184 = vpop.trf.xlu0
    %v1185 = vpop.trf.xlu0
    %v1186 = vpop.trf.xlu0
    %v1187 = vpop.trf.xlu0
    %v1188 = vpop.trf.xlu0
    %v1189 = vpop.trf.xlu0
    %v1190 = vpop.trf.xlu0
    %v1191 = vpop.trf.xlu0
    %v1192 = vpop.trf.xlu0
    %v1193 = vpop.trf.xlu0
    %v1194 = vpop.trf.xlu0
    %v1195 = vpop.trf.xlu0
    %v1196 = vpop.trf.xlu0
    %1197 = vxpose.xlu0.b32.start [1/16] %v1031, 128
    %1198 = vxpose.xlu0.b32.cont [2/16] 0.0, 128
    %1199 = vxpose.xlu0.b32.cont [3/16] 0.0, 128
    %1200 = vxpose.xlu0.b32.cont [4/16] 0.0, 128
    %1201 = vxpose.xlu0.b32.cont [5/16] 0.0, 128
    %1202 = vxpose.xlu0.b32.cont [6/16] 0.0, 128
    %1203 = vxpose.xlu0.b32.cont [7/16] 0.0, 128
    %1204 = vxpose.xlu0.b32.cont [8/16] 0.0, 128
    %1205 = vxpose.xlu0.b32.cont [9/16] 0.0, 128
    %1206 = vxpose.xlu0.b32.cont [10/16] 0.0, 128
    %1207 = vxpose.xlu0.b32.cont [11/16] 0.0, 128
    %1208 = vxpose.xlu0.b32.cont [12/16] 0.0, 128
    %1209 = vxpose.xlu0.b32.cont [13/16] 0.0, 128
    %1210 = vxpose.xlu0.b32.cont [14/16] 0.0, 128
    %1211 = vxpose.xlu0.b32.cont [15/16] 0.0, 128
    %1212 = vxpose.xlu0.b32.end [16/16] 0.0, 128
    %v1213 = vpop.trf.xlu0
    %v1214 = vpop.trf.xlu0
    %v1215 = vpop.trf.xlu0
    %v1216 = vpop.trf.xlu0
    %v1217 = vpop.trf.xlu0
    %v1218 = vpop.trf.xlu0
    %v1219 = vpop.trf.xlu0
    %v1220 = vpop.trf.xlu0
    %v1221 = vpop.trf.xlu0
    %v1222 = vpop.trf.xlu0
    %v1223 = vpop.trf.xlu0
    %v1224 = vpop.trf.xlu0
    %v1225 = vpop.trf.xlu0
    %v1226 = vpop.trf.xlu0
    %v1227 = vpop.trf.xlu0
    %v1228 = vpop.trf.xlu0
    %1229 = vxpose.xlu0.b32.start [1/16] %v1023, 128
    %1230 = vxpose.xlu0.b32.cont [2/16] 0.0, 128
    %1231 = vxpose.xlu0.b32.cont [3/16] 0.0, 128
    %1232 = vxpose.xlu0.b32.cont [4/16] 0.0, 128
    %1233 = vxpose.xlu0.b32.cont [5/16] 0.0, 128
    %1234 = vxpose.xlu0.b32.cont [6/16] 0.0, 128
    %1235 = vxpose.xlu0.b32.cont [7/16] 0.0, 128
    %1236 = vxpose.xlu0.b32.cont [8/16] 0.0, 128
    %1237 = vxpose.xlu0.b32.cont [9/16] 0.0, 128
    %1238 = vxpose.xlu0.b32.cont [10/16] 0.0, 128
    %1239 = vxpose.xlu0.b32.cont [11/16] 0.0, 128
    %1240 = vxpose.xlu0.b32.cont [12/16] 0.0, 128
    %1241 = vxpose.xlu0.b32.cont [13/16] 0.0, 128
    %1242 = vxpose.xlu0.b32.cont [14/16] 0.0, 128
    %1243 = vxpose.xlu0.b32.cont [15/16] 0.0, 128
    %1244 = vxpose.xlu0.b32.end [16/16] 0.0, 128
    %v1245 = vpop.trf.xlu0
    %v1246 = vpop.trf.xlu0
    %v1247 = vpop.trf.xlu0
    %v1248 = vpop.trf.xlu0
    %v1249 = vpop.trf.xlu0
    %v1250 = vpop.trf.xlu0
    %v1251 = vpop.trf.xlu0
    %v1252 = vpop.trf.xlu0
    %v1253 = vpop.trf.xlu0
    %v1254 = vpop.trf.xlu0
    %v1255 = vpop.trf.xlu0
    %v1256 = vpop.trf.xlu0
    %v1257 = vpop.trf.xlu0
    %v1258 = vpop.trf.xlu0
    %v1259 = vpop.trf.xlu0
    %v1260 = vpop.trf.xlu0
    %1261 = vxpose.xlu0.b32.start [1/16] %v1032, 128
    %1262 = vxpose.xlu0.b32.cont [2/16] 0.0, 128
    %1263 = vxpose.xlu0.b32.cont [3/16] 0.0, 128
    %1264 = vxpose.xlu0.b32.cont [4/16] 0.0, 128
    %1265 = vxpose.xlu0.b32.cont [5/16] 0.0, 128
    %1266 = vxpose.xlu0.b32.cont [6/16] 0.0, 128
    %1267 = vxpose.xlu0.b32.cont [7/16] 0.0, 128
    %1268 = vxpose.xlu0.b32.cont [8/16] 0.0, 128
    %1269 = vxpose.xlu0.b32.cont [9/16] 0.0, 128
    %1270 = vxpose.xlu0.b32.cont [10/16] 0.0, 128
    %1271 = vxpose.xlu0.b32.cont [11/16] 0.0, 128
    %1272 = vxpose.xlu0.b32.cont [12/16] 0.0, 128
    %1273 = vxpose.xlu0.b32.cont [13/16] 0.0, 128
    %1274 = vxpose.xlu0.b32.cont [14/16] 0.0, 128
    %1275 = vxpose.xlu0.b32.cont [15/16] 0.0, 128
    %1276 = vxpose.xlu0.b32.end [16/16] 0.0, 128
    %v1277 = vpop.trf.xlu0
    %v1278 = vpop.trf.xlu0
    %v1279 = vpop.trf.xlu0
    %v1280 = vpop.trf.xlu0
    %v1281 = vpop.trf.xlu0
    %v1282 = vpop.trf.xlu0
    %v1283 = vpop.trf.xlu0
    %v1284 = vpop.trf.xlu0
    %v1285 = vpop.trf.xlu0
    %v1286 = vpop.trf.xlu0
    %v1287 = vpop.trf.xlu0
    %v1288 = vpop.trf.xlu0
    %v1289 = vpop.trf.xlu0
    %v1290 = vpop.trf.xlu0
    %v1291 = vpop.trf.xlu0
    %v1292 = vpop.trf.xlu0
    %vm1293 = vcmask 27648
    %1294 = vst.msk [vmem:[%s6] sm:$0xf] %vm1293, %v1053
    %1295 = vst.msk [vmem:[%s6 + $0x4] sm:$0xf] %vm1293, %v1085
    %1296 = vst.msk [vmem:[%s6 + $0x8] sm:$0xf] %vm1293, %v1117
    %1297 = vst.msk [vmem:[%s6 + $0xc] sm:$0xf] %vm1293, %v1149
    %1298 = vst.msk [vmem:[%s6 + $0x10] sm:$0xf] %vm1293, %v1181
    %1299 = vst.msk [vmem:[%s6 + $0x14] sm:$0xf] %vm1293, %v1213
    %1300 = vst.msk [vmem:[%s6 + $0x18] sm:$0xf] %vm1293, %v1245
    %1301 = vst.msk [vmem:[%s6 + $0x1c] sm:$0xf] %vm1293, %v1277
    // Predicated region
    $region26: #{tpu_custom_call.1} parent=1 // pred_check
      _
    $region27: #{tpu_custom_call.1} parent=1 // pred_check_branch
      %1303 = sbr.rel (0) target = $region29
    $region28: #{tpu_custom_call.1} parent=1 // pred_region
      %1305 = vsyncadd [#allocation4], 0
      %s1306 = sshll.u32 [#allocation5], 4
      %s1307 = int_to_ptr.vmem [resolvable:$true] %s1306
      %s1308 = sshll.u32 %s5, 4
      %s1309 = int_to_ptr.hbm [resolvable:$true] %s1308
      %1314 = dma.vmem_to_hbm [thread:$0]  %s1307, 1024, %s1309, [#allocation4], 128, 128, 8
    $region29: #{tpu_custom_call.1} parent=1 // pred_fallthru
      _
    // Predicated region
    $region30: #{tpu_custom_call.1} parent=1 // pred_check
      _
    $region31: #{tpu_custom_call.1} parent=1 // pred_check_branch
      %1316 = sbr.rel (0) target = $region33
    $region32: #{tpu_custom_call.1} parent=1 // pred_region
      _
    $region33: #{tpu_custom_call.1} parent=1 // pred_fallthru
      _
    // Predicated region
    $region34: #{tpu_custom_call.1} parent=1 // pred_check
      _
    $region35: #{tpu_custom_call.1} parent=1 // pred_check_branch
      %1318 = sbr.rel (0) target = $region37
    $region36: #{tpu_custom_call.1} parent=1 // pred_region
      %1320 = dma.done [#allocation4], 1024
    $region37: #{tpu_custom_call.1} parent=1 // pred_fallthru
      _
    // Predicated region
    $region38: #{tpu_custom_call.1} parent=1 // pred_check
      _
    $region39: #{tpu_custom_call.1} parent=1 // pred_check_branch
      %1322 = sbr.rel (0) target = $region41
    $region40: #{tpu_custom_call.1} parent=1 // pred_region
      _
    $region41: #{tpu_custom_call.1} parent=1 // pred_fallthru
      _
    %1323 = vsyncpa [#allocation3], 1
    %1324 = vsyncpa [#allocation4], 1

</llo_original>
